<compile_context>
chip_gen: v5e
topology: v5e:2x2
jax: 0.10.0
libtpu: 0.0.40
codegen_flags: <defaults>
</compile_context>

<pallas_src>
import functools

import jax
import jax.numpy as jnp
from jax.experimental import pallas as pl
from jax.experimental.pallas import tpu as pltpu


def _round_up(v, m):
    return ((v + m - 1) // m) * m


def _cdiv(a, b):
    return -(-a // b)


# ---------------------------------------------------------------------------
# Pallas kernel: fused fc1->relu->fc2->relu->fc3->relu->fc4 for one batch tile.
# Weights (bf16) and biases (f32) live fully in VMEM as whole blocks; only the
# batch dim is gridded.  All matmuls are bf16 x bf16 -> f32 on the MXU.
# ---------------------------------------------------------------------------
def dqn_mlp_kernel(x_ref,
                   w1_ref, b1_ref,
                   w2_ref, b2_ref,
                   w3_ref, b3_ref,
                   w4_ref, b4_ref,
                   o_ref):
    bf16 = jnp.bfloat16
    x = x_ref[...].astype(bf16)                                      # (TB, Din)

    h = jnp.dot(x, w1_ref[...], preferred_element_type=jnp.float32) + b1_ref[...]
    h = jnp.maximum(h, 0.0).astype(bf16)                             # (TB, 128)

    h = jnp.dot(h, w2_ref[...], preferred_element_type=jnp.float32) + b2_ref[...]
    h = jnp.maximum(h, 0.0).astype(bf16)                             # (TB, 256)

    h = jnp.dot(h, w3_ref[...], preferred_element_type=jnp.float32) + b3_ref[...]
    h = jnp.maximum(h, 0.0).astype(bf16)                             # (TB, 128)

    out = jnp.dot(h, w4_ref[...], preferred_element_type=jnp.float32) + b4_ref[...]
    o_ref[...] = out.astype(o_ref.dtype)                             # (TB, Dout_p)


@functools.partial(jax.jit, static_argnames=("d_out", "batch_tile", "min_tiles"))
def dqn_forward(x, kparams, d_out, batch_tile=512, min_tiles=2):
    """x: (B, input_size) f32.  kparams: prepare_params() output.

    d_out: logical number of actions (static).  batch_tile: max rows per grid
    step.  min_tiles: minimum grid steps when B is large enough (v7x megacore).
    """
    B, d_in = x.shape
    w1, b1 = kparams["w1"], kparams["b1"]
    w2, b2 = kparams["w2"], kparams["b2"]
    w3, b3 = kparams["w3"], kparams["b3"]
    w4, b4 = kparams["w4"], kparams["b4"]
    h1, h2, h3 = w1.shape[1], w2.shape[1], w3.shape[1]
    d_out_p = w4.shape[1]                       # already padded to 128 at init

    # ---- Adaptive batch tiling (all static at trace time) -------------------
    # Enough tiles to cover B with <= batch_tile rows each, but at least
    # `min_tiles` when B >= min_tiles*8 so both v7x TensorCores get work.
    n_tiles = max(_cdiv(B, batch_tile), min_tiles if B >= min_tiles * 8 else 1)
    tb = _round_up(_cdiv(B, n_tiles), 8)
    B_p = tb * n_tiles

    # Only the batch dim is padded (no-op when B is already a multiple of tb).
    x_p = x if B_p == B else jnp.pad(x, ((0, B_p - B), (0, 0)))

    flops = 2 * B_p * (d_in * h1 + h1 * h2 + h2 * h3 + h3 * d_out_p)
    bytes_accessed = (
        4 * (B_p * d_in + B_p * d_out_p)                              # x, out (f32)
        + 2 * (d_in * h1 + h1 * h2 + h2 * h3 + h3 * d_out_p)          # weights (bf16)
        + 4 * (h1 + h2 + h3 + d_out_p)                                # biases (f32)
    )

    # Whole-array blocks with constant index_map -> stay VMEM-resident.
    full = lambda arr: pl.BlockSpec(arr.shape, lambda i: (0, 0))

    out = pl.pallas_call(
        dqn_mlp_kernel,
        out_shape=jax.ShapeDtypeStruct((B_p, d_out_p), jnp.float32),
        grid_spec=pltpu.PrefetchScalarGridSpec(
            num_scalar_prefetch=0,
            grid=(n_tiles,),
            in_specs=[
                pl.BlockSpec((tb, d_in), lambda i: (i, 0)),   # x tile (unpadded feats)
                full(w1), full(b1),
                full(w2), full(b2),
                full(w3), full(b3),
                full(w4), full(b4),
            ],
            out_specs=pl.BlockSpec((tb, d_out_p), lambda i: (i, 0)),
        ),
        compiler_params=pltpu.CompilerParams(
            dimension_semantics=("parallel",),   # shards batch tiles across TCs on v7x
        ),
        cost_estimate=pl.CostEstimate(
            flops=flops, transcendentals=0, bytes_accessed=bytes_accessed),
    )(x_p, w1, b1, w2, b2, w3, b3, w4, b4)

    # Slice back to the logical output shape (batch slice is a no-op when
    # B == B_p; downstream code that can consume the 128-wide padded output
    # may call with the padded width instead and skip this).
    return out[:B, :d_out]


# ---------------------------------------------------------------------------
# Deterministic parameter init matching torch.nn.Linear defaults:
# U(-1/sqrt(fan_in), 1/sqrt(fan_in)) for both weight and bias.
# Stored transposed: (in_features, out_features); bias as (1, out_features).
# ---------------------------------------------------------------------------
def init_params(key, input_size, output_size):
    sizes = [(input_size, 128), (128, 256), (256, 128), (128, output_size)]
    params = {}
    for idx, (fan_in, fan_out) in enumerate(sizes, start=1):
        key, kw, kb = jax.random.split(key, 3)
        bound = 1.0 / jnp.sqrt(jnp.float32(fan_in))
        params[f"w{idx}"] = jax.random.uniform(
            kw, (fan_in, fan_out), jnp.float32, minval=-bound, maxval=bound)
        params[f"b{idx}"] = jax.random.uniform(
            kb, (1, fan_out), jnp.float32, minval=-bound, maxval=bound)
    return params


def prepare_params(params):
    """One-time kernel-ready params: bf16 weights, last layer padded to 128 lanes."""
    d_out = params["w4"].shape[1]
    d_out_p = _round_up(max(d_out, 128), 128)
    bf16 = jnp.bfloat16
    return {
        "w1": params["w1"].astype(bf16), "b1": params["b1"],
        "w2": params["w2"].astype(bf16), "b2": params["b2"],
        "w3": params["w3"].astype(bf16), "b3": params["b3"],
        "w4": jnp.pad(params["w4"], ((0, 0), (0, d_out_p - d_out))).astype(bf16),
        "b4": jnp.pad(params["b4"], ((0, 0), (0, d_out_p - d_out))),
    }


# ---------------------------------------------------------------------------
# References.
# ---------------------------------------------------------------------------
def reference_forward(x, p):
    """Pure-f32 reference (exact PyTorch fp32 semantics)."""
    h = jnp.maximum(x @ p["w1"] + p["b1"], 0.0)
    h = jnp.maximum(h @ p["w2"] + p["b2"], 0.0)
    h = jnp.maximum(h @ p["w3"] + p["b3"], 0.0)
    return h @ p["w4"] + p["b4"]


def reference_forward_bf16(x, p):
    """Reference with the same bf16-operand / f32-accumulate math as the kernel."""
    bf16 = jnp.bfloat16
    dot = lambda a, w: jnp.dot(a.astype(bf16), w.astype(bf16),
                               preferred_element_type=jnp.float32)
    h = jnp.maximum(dot(x, p["w1"]) + p["b1"], 0.0)
    h = jnp.maximum(dot(h, p["w2"]) + p["b2"], 0.0)
    h = jnp.maximum(dot(h, p["w3"]) + p["b3"], 0.0)
    return dot(h, p["w4"]) + p["b4"]


if __name__ == "__main__":
    input_size = 32     # e.g. state dimension of the car environment
    output_size = 8     # e.g. number of discrete actions

    key = jax.random.PRNGKey(0)
    kp, kx1, kx2 = jax.random.split(key, 3)
    raw_params = init_params(kp, input_size, output_size)
    kparams = prepare_params(raw_params)   # bf16 + padded, done once

    # 1) Small batch (acting path) -> single grid step.
    x_small = jax.random.normal(kx1, (8, input_size), jnp.float32)
    out_small = jax.block_until_ready(dqn_forward(x_small, kparams, output_size))
    assert out_small.shape == (8, output_size)
    assert jnp.allclose(out_small, reference_forward_bf16(x_small, raw_params),
                        atol=1e-3, rtol=1e-3), "small-batch mismatch (bf16 ref)"
    assert jnp.allclose(out_small, reference_forward(x_small, raw_params),
                        atol=5e-2, rtol=5e-2), "small-batch mismatch (f32 ref)"

    # 2) Non-divisible training batch -> 2 parallel 256-row tiles (12 pad rows).
    x_big = jax.random.normal(kx2, (500, input_size), jnp.float32)
    out_big = jax.block_until_ready(dqn_forward(x_big, kparams, output_size))
    assert out_big.shape == (500, output_size)
    assert jnp.allclose(out_big, reference_forward_bf16(x_big, raw_params),
                        atol=1e-3, rtol=1e-3), "large-batch mismatch (bf16 ref)"
    assert jnp.allclose(out_big, reference_forward(x_big, raw_params),
                        atol=5e-2, rtol=5e-2), "large-batch mismatch (f32 ref)"

    # TODO(synk): weight specs could use pipeline_mode=pl.Buffered(1) to drop the
    # unused second buffer; skipped since VMEM footprint is ~1 MiB (ample headroom).
    print("KERNEL_OK")
</pallas_src>

<mosaic_0001>
module attributes {stable_mosaic.version = 11 : i64} {
  func.func @dqn_mlp_kernel(%arg0: i32, %arg1: memref<8x32xf32, #tpu.memory_space<vmem>>, %arg2: memref<32x128xbf16, #tpu.memory_space<vmem>>, %arg3: memref<1x128xf32, #tpu.memory_space<vmem>>, %arg4: memref<128x256xbf16, #tpu.memory_space<vmem>>, %arg5: memref<1x256xf32, #tpu.memory_space<vmem>>, %arg6: memref<256x128xbf16, #tpu.memory_space<vmem>>, %arg7: memref<1x128xf32, #tpu.memory_space<vmem>>, %arg8: memref<128x128xbf16, #tpu.memory_space<vmem>>, %arg9: memref<1x128xf32, #tpu.memory_space<vmem>>, %arg10: memref<8x128xf32, #tpu.memory_space<vmem>>) attributes {dimension_semantics = [#tpu.dimension_semantics<parallel>], iteration_bounds = array<i64: 1>, scalar_prefetch = 0 : i64, scratch_operands = 0 : i64, tpu.core_type = #tpu.core_type<tc>, window_params = [{transform_indices = @transform_0, window_bounds = array<i64: 8, 32>}, {pipeline_mode = #tpu.pipeline_mode<synchronous>, transform_indices = @transform_1, window_bounds = array<i64: 32, 128>}, {pipeline_mode = #tpu.pipeline_mode<synchronous>, transform_indices = @transform_2, window_bounds = array<i64: 1, 128>}, {pipeline_mode = #tpu.pipeline_mode<synchronous>, transform_indices = @transform_3, window_bounds = array<i64: 128, 256>}, {pipeline_mode = #tpu.pipeline_mode<synchronous>, transform_indices = @transform_4, window_bounds = array<i64: 1, 256>}, {pipeline_mode = #tpu.pipeline_mode<synchronous>, transform_indices = @transform_5, window_bounds = array<i64: 256, 128>}, {pipeline_mode = #tpu.pipeline_mode<synchronous>, transform_indices = @transform_6, window_bounds = array<i64: 1, 128>}, {pipeline_mode = #tpu.pipeline_mode<synchronous>, transform_indices = @transform_7, window_bounds = array<i64: 128, 128>}, {pipeline_mode = #tpu.pipeline_mode<synchronous>, transform_indices = @transform_8, window_bounds = array<i64: 1, 128>}, {transform_indices = @transform_9, window_bounds = array<i64: 8, 128>}]} {
    %c0 = arith.constant 0 : index
    %c0_0 = arith.constant 0 : index
    %0 = vector.load %arg1[%c0, %c0_0] : memref<8x32xf32, #tpu.memory_space<vmem>>, vector<8x32xf32>
    %1 = arith.truncf %0 : vector<8x32xf32> to vector<8x32xbf16>
    %c0_1 = arith.constant 0 : index
    %c0_2 = arith.constant 0 : index
    %2 = vector.load %arg2[%c0_1, %c0_2] : memref<32x128xbf16, #tpu.memory_space<vmem>>, vector<32x128xbf16>
    %cst = arith.constant dense<0.000000e+00> : vector<8x128xf32>
    %3 = tpu.matmul %1, %2, %cst {dimension_numbers = #tpu.dot_dimension_numbers<[1], [0], [0], [1], [0, 0, 1, 1], [], []>} : vector<8x32xbf16>, vector<32x128xbf16>, vector<8x128xf32> -> vector<8x128xf32>
    %c0_3 = arith.constant 0 : index
    %c0_4 = arith.constant 0 : index
    %4 = vector.load %arg3[%c0_3, %c0_4] : memref<1x128xf32, #tpu.memory_space<vmem>>, vector<1x128xf32>
    %5 = vector.broadcast %4 : vector<1x128xf32> to vector<8x128xf32>
    %6 = arith.addf %3, %5 : vector<8x128xf32>
    %cst_5 = arith.constant 0.000000e+00 : f32
    %7 = vector.broadcast %cst_5 : f32 to vector<8x128xf32>
    %8 = arith.maximumf %6, %7 : vector<8x128xf32>
    %9 = arith.truncf %8 : vector<8x128xf32> to vector<8x128xbf16>
    %c0_6 = arith.constant 0 : index
    %c0_7 = arith.constant 0 : index
    %10 = vector.load %arg4[%c0_6, %c0_7] : memref<128x256xbf16, #tpu.memory_space<vmem>>, vector<128x256xbf16>
    %cst_8 = arith.constant dense<0.000000e+00> : vector<8x256xf32>
    %11 = tpu.matmul %9, %10, %cst_8 {dimension_numbers = #tpu.dot_dimension_numbers<[1], [0], [0], [1], [0, 0, 1, 1], [], []>} : vector<8x128xbf16>, vector<128x256xbf16>, vector<8x256xf32> -> vector<8x256xf32>
    %c0_9 = arith.constant 0 : index
    %c0_10 = arith.constant 0 : index
    %12 = vector.load %arg5[%c0_9, %c0_10] : memref<1x256xf32, #tpu.memory_space<vmem>>, vector<1x256xf32>
    %13 = vector.broadcast %12 : vector<1x256xf32> to vector<8x256xf32>
    %14 = arith.addf %11, %13 : vector<8x256xf32>
    %cst_11 = arith.constant 0.000000e+00 : f32
    %15 = vector.broadcast %cst_11 : f32 to vector<8x256xf32>
    %16 = arith.maximumf %14, %15 : vector<8x256xf32>
    %17 = arith.truncf %16 : vector<8x256xf32> to vector<8x256xbf16>
    %c0_12 = arith.constant 0 : index
    %c0_13 = arith.constant 0 : index
    %18 = vector.load %arg6[%c0_12, %c0_13] : memref<256x128xbf16, #tpu.memory_space<vmem>>, vector<256x128xbf16>
    %cst_14 = arith.constant dense<0.000000e+00> : vector<8x128xf32>
    %19 = tpu.matmul %17, %18, %cst_14 {dimension_numbers = #tpu.dot_dimension_numbers<[1], [0], [0], [1], [0, 0, 1, 1], [], []>} : vector<8x256xbf16>, vector<256x128xbf16>, vector<8x128xf32> -> vector<8x128xf32>
    %c0_15 = arith.constant 0 : index
    %c0_16 = arith.constant 0 : index
    %20 = vector.load %arg7[%c0_15, %c0_16] : memref<1x128xf32, #tpu.memory_space<vmem>>, vector<1x128xf32>
    %21 = vector.broadcast %20 : vector<1x128xf32> to vector<8x128xf32>
    %22 = arith.addf %19, %21 : vector<8x128xf32>
    %cst_17 = arith.constant 0.000000e+00 : f32
    %23 = vector.broadcast %cst_17 : f32 to vector<8x128xf32>
    %24 = arith.maximumf %22, %23 : vector<8x128xf32>
    %25 = arith.truncf %24 : vector<8x128xf32> to vector<8x128xbf16>
    %c0_18 = arith.constant 0 : index
    %c0_19 = arith.constant 0 : index
    %26 = vector.load %arg8[%c0_18, %c0_19] : memref<128x128xbf16, #tpu.memory_space<vmem>>, vector<128x128xbf16>
    %cst_20 = arith.constant dense<0.000000e+00> : vector<8x128xf32>
    %27 = tpu.matmul %25, %26, %cst_20 {dimension_numbers = #tpu.dot_dimension_numbers<[1], [0], [0], [1], [0, 0, 1, 1], [], []>} : vector<8x128xbf16>, vector<128x128xbf16>, vector<8x128xf32> -> vector<8x128xf32>
    %c0_21 = arith.constant 0 : index
    %c0_22 = arith.constant 0 : index
    %28 = vector.load %arg9[%c0_21, %c0_22] : memref<1x128xf32, #tpu.memory_space<vmem>>, vector<1x128xf32>
    %29 = vector.broadcast %28 : vector<1x128xf32> to vector<8x128xf32>
    %30 = arith.addf %27, %29 : vector<8x128xf32>
    %c0_23 = arith.constant 0 : index
    %c0_24 = arith.constant 0 : index
    %31 = vector.load %arg10[%c0_23, %c0_24] : memref<8x128xf32, #tpu.memory_space<vmem>>, vector<8x128xf32>
    tpu.vector_store %arg10[%c0_23, %c0_24], %30 {strides = array<i32>} : memref<8x128xf32, #tpu.memory_space<vmem>>, vector<8x128xf32>,
    return
  }
  func.func @transform_0(%arg0: i32) -> (i32, i32) {
    %c0_i32 = arith.constant 0 : i32
    %c0_i32_0 = arith.constant 0 : i32
    return %arg0, %c0_i32 : i32, i32
  }
  func.func @transform_1(%arg0: i32) -> (i32, i32) {
    %c0_i32 = arith.constant 0 : i32
    %c0_i32_0 = arith.constant 0 : i32
    %c0_i32_1 = arith.constant 0 : i32
    return %c0_i32, %c0_i32_0 : i32, i32
  }
  func.func @transform_2(%arg0: i32) -> (i32, i32) {
    %c0_i32 = arith.constant 0 : i32
    %c0_i32_0 = arith.constant 0 : i32
    %c0_i32_1 = arith.constant 0 : i32
    return %c0_i32, %c0_i32_0 : i32, i32
  }
  func.func @transform_3(%arg0: i32) -> (i32, i32) {
    %c0_i32 = arith.constant 0 : i32
    %c0_i32_0 = arith.constant 0 : i32
    %c0_i32_1 = arith.constant 0 : i32
    return %c0_i32, %c0_i32_0 : i32, i32
  }
  func.func @transform_4(%arg0: i32) -> (i32, i32) {
    %c0_i32 = arith.constant 0 : i32
    %c0_i32_0 = arith.constant 0 : i32
    %c0_i32_1 = arith.constant 0 : i32
    return %c0_i32, %c0_i32_0 : i32, i32
  }
  func.func @transform_5(%arg0: i32) -> (i32, i32) {
    %c0_i32 = arith.constant 0 : i32
    %c0_i32_0 = arith.constant 0 : i32
    %c0_i32_1 = arith.constant 0 : i32
    return %c0_i32, %c0_i32_0 : i32, i32
  }
  func.func @transform_6(%arg0: i32) -> (i32, i32) {
    %c0_i32 = arith.constant 0 : i32
    %c0_i32_0 = arith.constant 0 : i32
    %c0_i32_1 = arith.constant 0 : i32
    return %c0_i32, %c0_i32_0 : i32, i32
  }
  func.func @transform_7(%arg0: i32) -> (i32, i32) {
    %c0_i32 = arith.constant 0 : i32
    %c0_i32_0 = arith.constant 0 : i32
    %c0_i32_1 = arith.constant 0 : i32
    return %c0_i32, %c0_i32_0 : i32, i32
  }
  func.func @transform_8(%arg0: i32) -> (i32, i32) {
    %c0_i32 = arith.constant 0 : i32
    %c0_i32_0 = arith.constant 0 : i32
    %c0_i32_1 = arith.constant 0 : i32
    return %c0_i32, %c0_i32_0 : i32, i32
  }
  func.func @transform_9(%arg0: i32) -> (i32, i32) {
    %c0_i32 = arith.constant 0 : i32
    %c0_i32_0 = arith.constant 0 : i32
    return %arg0, %c0_i32 : i32, i32
  }
}

</mosaic_0001>

<llo_original>
// kernel: dqn_forward.1
$region0: #{dqn_forward.1}
  #allocation0 [shape = 'u32[]', space=smem, size = 0x4, offset = 0x4, fixed_abs, tag = 'smem constant byte address 0x4 - core index']
  #allocation1 [shape = 'u32[72,128]{1,0:T(1,128)}', space=vmem, size = 0x9000, scoped, tag = 'internal scratch']
  %s0 = inlined_call_operand.hbm [shape: f32[8,32], index: 0, kind: input, shape index: {}]
  %s1 = inlined_call_operand.hbm [shape: bf16[32,128], index: 1, kind: input, shape index: {}]
  %s2 = inlined_call_operand.hbm [shape: f32[1,128], index: 2, kind: input, shape index: {}]
  %s3 = inlined_call_operand.hbm [shape: bf16[128,256], index: 3, kind: input, shape index: {}]
  %s4 = inlined_call_operand.hbm [shape: f32[1,256], index: 4, kind: input, shape index: {}]
  %s5 = inlined_call_operand.hbm [shape: bf16[256,128], index: 5, kind: input, shape index: {}]
  %s6 = inlined_call_operand.vmem [shape: f32[1,128], index: 6, kind: input, shape index: {}]
  %s7 = inlined_call_operand.hbm [shape: bf16[128,128], index: 7, kind: input, shape index: {}]
  %s8 = inlined_call_operand.vmem [shape: f32[1,128], index: 8, kind: input, shape index: {}]
  %s9 = inlined_call_operand.hbm [shape: f32[8,128], index: 9, kind: output, shape index: {}]
  %s10 = sld [smem:[#allocation0]]
  $region74: #{dqn_forward.1} parent=0
    _
  %s12 = ssub.s32 1, %s10
  %s13 = scalar_select 0, %s12, %s10
  $region1: #{dqn_forward.1} parent=0
    #allocation2 [shape = 'u8[4096]{0}', space=vmem, size = 0x1000, scoped, tag = 'input window, operand 0, single buffered']
    #allocation3 [shape = 's32[1]{0}', space=sflag, size = 0x4, scoped, tag = 'scoped memory for dqn_forward.1']
    #allocation4 [shape = 's32[1]{0}', space=sflag, size = 0x4, scoped, tag = 'scoped memory for dqn_forward.1']
    #allocation5 [shape = 'u8[8192]{0}', space=vmem, size = 0x2000, scoped, tag = 'input window, operand 1, single buffered']
    #allocation6 [shape = 's32[1]{0}', space=sflag, size = 0x4, scoped, tag = 'scoped memory for dqn_forward.1']
    #allocation7 [shape = 'u8[512]{0}', space=vmem, size = 0x400, scoped, tag = 'input window, operand 2, single buffered']
    #allocation8 [shape = 'u8[65536]{0}', space=vmem, size = 0x10000, scoped, tag = 'input window, operand 3, single buffered']
    #allocation9 [shape = 's32[1]{0}', space=sflag, size = 0x4, scoped, tag = 'scoped memory for dqn_forward.1']
    #allocation10 [shape = 'u8[1024]{0}', space=vmem, size = 0x400, scoped, tag = 'input window, operand 4, single buffered']
    #allocation11 [shape = 'u8[65536]{0}', space=vmem, size = 0x10000, scoped, tag = 'input window, operand 5, single buffered']
    #allocation12 [shape = 's32[1]{0}', space=sflag, size = 0x4, scoped, tag = 'scoped memory for dqn_forward.1']
    #allocation13 [shape = 'u8[32768]{0}', space=vmem, size = 0x8000, scoped, tag = 'input window, operand 7, single buffered']
    #allocation14 [shape = 'u8[4096]{0}', space=vmem, size = 0x1000, scoped, tag = 'output window, operand 0, single buffered']
    %14 = vsyncpa [#allocation3], 0
    %15 = vsyncpa [#allocation6], 0
    %16 = vsyncpa [#allocation9], 0
    %17 = vsyncpa [#allocation12], 0
    %18 = vsyncpa [#allocation4], 0
    // Predicated region
    $region2: #{dqn_forward.1} parent=1 // pred_check
      _
    $region3: #{dqn_forward.1} parent=1 // pred_check_branch
      %20 = sbr.rel (0) target = $region5
    $region4: #{dqn_forward.1} parent=1 // pred_region
      %22 = vsyncadd [#allocation3], 0
      %s24 = sshll.u32 %s0, 4
      %s25 = int_to_ptr.hbm [resolvable:$true] %s24
      %s26 = sshll.u32 [#allocation2], 4
      %s27 = int_to_ptr.vmem [resolvable:$true] %s26
      %29 = dma.hbm_to_vmem [thread:$0]  %s25, 128, %s27, [#allocation3]
    $region5: #{dqn_forward.1} parent=1 // pred_fallthru
      _
    // Predicated region
    $region6: #{dqn_forward.1} parent=1 // pred_check
      _
    $region7: #{dqn_forward.1} parent=1 // pred_check_branch
      %31 = sbr.rel (0) target = $region9
    $region8: #{dqn_forward.1} parent=1 // pred_region
      %33 = vsyncadd [#allocation6], 0
      %s34 = sshll.u32 %s1, 4
      %s35 = int_to_ptr.hbm [resolvable:$true] %s34
      %s36 = sshll.u32 [#allocation5], 4
      %s37 = int_to_ptr.vmem [resolvable:$true] %s36
      %42 = dma.hbm_to_vmem [thread:$0]  %s35, 256, %s37, [#allocation6], 64, 64, 4
    $region9: #{dqn_forward.1} parent=1 // pred_fallthru
      _
    // Predicated region
    $region10: #{dqn_forward.1} parent=1 // pred_check
      _
    $region11: #{dqn_forward.1} parent=1 // pred_check_branch
      %44 = sbr.rel (0) target = $region13
    $region12: #{dqn_forward.1} parent=1 // pred_region
      %46 = vsyncadd [#allocation6], 0
      %s48 = sshll.u32 %s2, 4
      %s49 = int_to_ptr.hbm [resolvable:$true] %s48
      %s50 = sshll.u32 [#allocation7], 4
      %s51 = int_to_ptr.vmem [resolvable:$true] %s50
      %53 = dma.hbm_to_vmem [thread:$0]  %s49, 16, %s51, [#allocation6]
    $region13: #{dqn_forward.1} parent=1 // pred_fallthru
      _
    // Predicated region
    $region14: #{dqn_forward.1} parent=1 // pred_check
      _
    $region15: #{dqn_forward.1} parent=1 // pred_check_branch
      %55 = sbr.rel (0) target = $region17
    $region16: #{dqn_forward.1} parent=1 // pred_region
      %57 = vsyncadd [#allocation9], 0
      %s58 = sshll.u32 %s3, 4
      %s59 = int_to_ptr.hbm [resolvable:$true] %s58
      %s60 = sshll.u32 [#allocation8], 4
      %s61 = int_to_ptr.vmem [resolvable:$true] %s60
      %66 = dma.hbm_to_vmem [thread:$0]  %s59, 2048, %s61, [#allocation9], 128, 128, 8
    $region17: #{dqn_forward.1} parent=1 // pred_fallthru
      _
    // Predicated region
    $region18: #{dqn_forward.1} parent=1 // pred_check
      _
    $region19: #{dqn_forward.1} parent=1 // pred_check_branch
      %68 = sbr.rel (0) target = $region21
    $region20: #{dqn_forward.1} parent=1 // pred_region
      %70 = vsyncadd [#allocation9], 0
      %s72 = sshll.u32 %s4, 4
      %s73 = int_to_ptr.hbm [resolvable:$true] %s72
      %s74 = sshll.u32 [#allocation10], 4
      %s75 = int_to_ptr.vmem [resolvable:$true] %s74
      %77 = dma.hbm_to_vmem [thread:$0]  %s73, 32, %s75, [#allocation9]
    $region21: #{dqn_forward.1} parent=1 // pred_fallthru
      _
    // Predicated region
    $region22: #{dqn_forward.1} parent=1 // pred_check
      _
    $region23: #{dqn_forward.1} parent=1 // pred_check_branch
      %79 = sbr.rel (0) target = $region25
    $region24: #{dqn_forward.1} parent=1 // pred_region
      %81 = vsyncadd [#allocation12], 0
      %s82 = sshll.u32 %s5, 4
      %s83 = int_to_ptr.hbm [resolvable:$true] %s82
      %s84 = sshll.u32 [#allocation11], 4
      %s85 = int_to_ptr.vmem [resolvable:$true] %s84
      %90 = dma.hbm_to_vmem [thread:$0]  %s83, 2048, %s85, [#allocation12], 64, 64, 4
    $region25: #{dqn_forward.1} parent=1 // pred_fallthru
      _
    // Predicated region
    $region26: #{dqn_forward.1} parent=1 // pred_check
      _
    $region27: #{dqn_forward.1} parent=1 // pred_check_branch
      %92 = sbr.rel (0) target = $region29
    $region28: #{dqn_forward.1} parent=1 // pred_region
      _
    $region29: #{dqn_forward.1} parent=1 // pred_fallthru
      _
    // Predicated region
    $region30: #{dqn_forward.1} parent=1 // pred_check
      _
    $region31: #{dqn_forward.1} parent=1 // pred_check_branch
      %94 = sbr.rel (0) target = $region33
    $region32: #{dqn_forward.1} parent=1 // pred_region
      %96 = vsyncadd [#allocation12], 0
      %s97 = sshll.u32 %s7, 4
      %s98 = int_to_ptr.hbm [resolvable:$true] %s97
      %s99 = sshll.u32 [#allocation13], 4
      %s100 = int_to_ptr.vmem [resolvable:$true] %s99
      %105 = dma.hbm_to_vmem [thread:$0]  %s98, 1024, %s100, [#allocation12], 64, 64, 4
    $region33: #{dqn_forward.1} parent=1 // pred_fallthru
      _
    // Predicated region
    $region34: #{dqn_forward.1} parent=1 // pred_check
      _
    $region35: #{dqn_forward.1} parent=1 // pred_check_branch
      %107 = sbr.rel (0) target = $region37
    $region36: #{dqn_forward.1} parent=1 // pred_region
      _
    $region37: #{dqn_forward.1} parent=1 // pred_fallthru
      _
    // Predicated region
    $region38: #{dqn_forward.1} parent=1 // pred_check
      _
    $region39: #{dqn_forward.1} parent=1 // pred_check_branch
      %109 = sbr.rel (0) target = $region41
    $region40: #{dqn_forward.1} parent=1 // pred_region
      %111 = dma.done [#allocation3], 128
    $region41: #{dqn_forward.1} parent=1 // pred_fallthru
      _
    // Predicated region
    $region42: #{dqn_forward.1} parent=1 // pred_check
      _
    $region43: #{dqn_forward.1} parent=1 // pred_check_branch
      %113 = sbr.rel (0) target = $region45
    $region44: #{dqn_forward.1} parent=1 // pred_region
      %115 = dma.done [#allocation6], 256
    $region45: #{dqn_forward.1} parent=1 // pred_fallthru
      _
    // Predicated region
    $region46: #{dqn_forward.1} parent=1 // pred_check
      _
    $region47: #{dqn_forward.1} parent=1 // pred_check_branch
      %117 = sbr.rel (0) target = $region49
    $region48: #{dqn_forward.1} parent=1 // pred_region
      %119 = dma.done [#allocation6], 16
    $region49: #{dqn_forward.1} parent=1 // pred_fallthru
      _
    // Predicated region
    $region50: #{dqn_forward.1} parent=1 // pred_check
      _
    $region51: #{dqn_forward.1} parent=1 // pred_check_branch
      %121 = sbr.rel (0) target = $region53
    $region52: #{dqn_forward.1} parent=1 // pred_region
      %123 = dma.done [#allocation9], 2048
    $region53: #{dqn_forward.1} parent=1 // pred_fallthru
      _
    // Predicated region
    $region54: #{dqn_forward.1} parent=1 // pred_check
      _
    $region55: #{dqn_forward.1} parent=1 // pred_check_branch
      %125 = sbr.rel (0) target = $region57
    $region56: #{dqn_forward.1} parent=1 // pred_region
      %127 = dma.done [#allocation9], 32
    $region57: #{dqn_forward.1} parent=1 // pred_fallthru
      _
    // Predicated region
    $region58: #{dqn_forward.1} parent=1 // pred_check
      _
    $region59: #{dqn_forward.1} parent=1 // pred_check_branch
      %129 = sbr.rel (0) target = $region61
    $region60: #{dqn_forward.1} parent=1 // pred_region
      %131 = dma.done [#allocation12], 2048
    $region61: #{dqn_forward.1} parent=1 // pred_fallthru
      _
    // Predicated region
    $region62: #{dqn_forward.1} parent=1 // pred_check
      _
    $region63: #{dqn_forward.1} parent=1 // pred_check_branch
      %133 = sbr.rel (0) target = $region65
    $region64: #{dqn_forward.1} parent=1 // pred_region
      %135 = dma.done [#allocation12], 1024
    $region65: #{dqn_forward.1} parent=1 // pred_fallthru
      _
    %v137 = vld [vmem:[#allocation2] sm:$0xff]
    %v138 = vpack.c.bf16 %v137, %v137
    %v139 = vld [vmem:[#allocation5] sm:$0xf]
    %v140 = vld [vmem:[#allocation5 + $0x4] sm:$0xf]
    %v141 = vld [vmem:[#allocation5 + $0x8] sm:$0xf]
    %v142 = vld [vmem:[#allocation5 + $0xc] sm:$0xf]
    %v143 = vld [vmem:[#allocation7] sm:$0x1]
    %v145 = vperm.slane %v143, 0
    %v151 = vunpack.c.l.b16 %v139
    %v152 = vunpack.c.l.b16 %v140
    %v153 = vunpack.c.l.b16 %v141
    %v154 = vunpack.c.l.b16 %v142
    %v155 = vpack.c.b16 %v152, %v151
    %v156 = vpack.c.b16 %v154, %v153
    %vm159 = vcmask 261120
    %v161 = vsel %vm159, %v138, 0
    %163 = vmatpush.bf16.msra.mxu0 0
    %164 = vmatpush.bf16.msra.mxu0 0
    %165 = vmatpush.bf16.msra.mxu0 0
    %166 = vmatpush.bf16.msra.mxu0 0
    %167 = vmatpush.bf16.msra.mxu0 0
    %168 = vmatpush.bf16.msra.mxu0 0
    %169 = vmatpush.bf16.msra.mxu0 %v156
    %170 = vmatpush.bf16.msra.mxu0 %v155
    %171 = vmatmul.bf16.gmra.mxu0 %v161
    %v172 = vpop.f32.mrf.mxu0
    %v173 = vadd.f32 %v145, %v172
    %v174 = vpop.f32.mrf.mxu0
    %175 = vdwg.mxu0
    %v176 = vmax.f32 %v173, 0.0
    %v177 = vpack.c.bf16 %v176, %v176
    %v178 = vld [vmem:[#allocation8] sm:$0xff]
    %v179 = vld [vmem:[#allocation8 + $0x8] sm:$0xff]
    %v180 = vld [vmem:[#allocation8 + $0x10] sm:$0xff]
    %v181 = vld [vmem:[#allocation8 + $0x18] sm:$0xff]
    %v182 = vld [vmem:[#allocation8 + $0x20] sm:$0xff]
    %v183 = vld [vmem:[#allocation8 + $0x28] sm:$0xff]
    %v184 = vld [vmem:[#allocation8 + $0x30] sm:$0xff]
    %v185 = vld [vmem:[#allocation8 + $0x38] sm:$0xff]
    %v186 = vld [vmem:[#allocation8 + $0x40] sm:$0xff]
    %v187 = vld [vmem:[#allocation8 + $0x48] sm:$0xff]
    %v188 = vld [vmem:[#allocation8 + $0x50] sm:$0xff]
    %v189 = vld [vmem:[#allocation8 + $0x58] sm:$0xff]
    %v190 = vld [vmem:[#allocation8 + $0x60] sm:$0xff]
    %v191 = vld [vmem:[#allocation8 + $0x68] sm:$0xff]
    %v192 = vld [vmem:[#allocation8 + $0x70] sm:$0xff]
    %v193 = vld [vmem:[#allocation8 + $0x78] sm:$0xff]
    %v194 = vld [vmem:[#allocation10] sm:$0x3]
    %v196 = vperm.slane %v194, 0
    %v197 = vperm.slane %v194, 1
    %v216 = vunpack.c.l.b16 %v178
    %v217 = vunpack.c.h.b16 %v178
    %v218 = vunpack.c.l.b16 %v179
    %v219 = vunpack.c.h.b16 %v179
    %v220 = vunpack.c.l.b16 %v180
    %v221 = vunpack.c.h.b16 %v180
    %v222 = vunpack.c.l.b16 %v181
    %v223 = vunpack.c.h.b16 %v181
    %v224 = vunpack.c.l.b16 %v182
    %v225 = vunpack.c.h.b16 %v182
    %v226 = vunpack.c.l.b16 %v183
    %v227 = vunpack.c.h.b16 %v183
    %v228 = vunpack.c.l.b16 %v184
    %v229 = vunpack.c.h.b16 %v184
    %v230 = vunpack.c.l.b16 %v185
    %v231 = vunpack.c.h.b16 %v185
    %v232 = vunpack.c.l.b16 %v186
    %v233 = vunpack.c.h.b16 %v186
    %v234 = vunpack.c.l.b16 %v187
    %v235 = vunpack.c.h.b16 %v187
    %v236 = vunpack.c.l.b16 %v188
    %v237 = vunpack.c.h.b16 %v188
    %v238 = vunpack.c.l.b16 %v189
    %v239 = vunpack.c.h.b16 %v189
    %v240 = vunpack.c.l.b16 %v190
    %v241 = vunpack.c.h.b16 %v190
    %v242 = vunpack.c.l.b16 %v191
    %v243 = vunpack.c.h.b16 %v191
    %v244 = vunpack.c.l.b16 %v192
    %v245 = vunpack.c.h.b16 %v192
    %v246 = vunpack.c.l.b16 %v193
    %v247 = vunpack.c.h.b16 %v193
    %v248 = vpack.c.b16 %v218, %v216
    %v249 = vpack.c.b16 %v219, %v217
    %v250 = vpack.c.b16 %v222, %v220
    %v251 = vpack.c.b16 %v223, %v221
    %v252 = vpack.c.b16 %v226, %v224
    %v253 = vpack.c.b16 %v227, %v225
    %v254 = vpack.c.b16 %v230, %v228
    %v255 = vpack.c.b16 %v231, %v229
    %v256 = vpack.c.b16 %v234, %v232
    %v257 = vpack.c.b16 %v235, %v233
    %v258 = vpack.c.b16 %v238, %v236
    %v259 = vpack.c.b16 %v239, %v237
    %v260 = vpack.c.b16 %v242, %v240
    %v261 = vpack.c.b16 %v243, %v241
    %v262 = vpack.c.b16 %v246, %v244
    %v263 = vpack.c.b16 %v247, %v245
    %280 = vmatpush.bf16.msra.mxu0 %v262
    %281 = vmatpush.bf16.msra.mxu0 %v260
    %282 = vmatpush.bf16.msra.mxu0 %v258
    %283 = vmatpush.bf16.msra.mxu0 %v256
    %284 = vmatpush.bf16.msra.mxu0 %v254
    %285 = vmatpush.bf16.msra.mxu0 %v252
    %286 = vmatpush.bf16.msra.mxu0 %v250
    %287 = vmatpush.bf16.msra.mxu0 %v248
    %288 = vmatmul.bf16.gmra.mxu0 %v177
    %v289 = vpop.f32.mrf.mxu0
    %v290 = vadd.f32 %v196, %v289
    %v291 = vpop.f32.mrf.mxu0
    %292 = vdwg.mxu0
    %293 = vmatpush.bf16.msra.mxu0 %v263
    %294 = vmatpush.bf16.msra.mxu0 %v261
    %295 = vmatpush.bf16.msra.mxu0 %v259
    %296 = vmatpush.bf16.msra.mxu0 %v257
    %297 = vmatpush.bf16.msra.mxu0 %v255
    %298 = vmatpush.bf16.msra.mxu0 %v253
    %299 = vmatpush.bf16.msra.mxu0 %v251
    %300 = vmatpush.bf16.msra.mxu0 %v249
    %301 = vmatmul.bf16.gmra.mxu0 %v177
    %v302 = vpop.f32.mrf.mxu0
    %v303 = vadd.f32 %v197, %v302
    %v304 = vpop.f32.mrf.mxu0
    %305 = vdwg.mxu0
    %v306 = vmax.f32 %v290, 0.0
    %v307 = vmax.f32 %v303, 0.0
    %v308 = vpack.c.bf16 %v306, %v306
    %v309 = vpack.c.bf16 %v307, %v307
    %v310 = vld [vmem:[#allocation11] sm:$0xf]
    %v311 = vld [vmem:[#allocation11 + $0x4] sm:$0xf]
    %v312 = vld [vmem:[#allocation11 + $0x8] sm:$0xf]
    %v313 = vld [vmem:[#allocation11 + $0xc] sm:$0xf]
    %v314 = vld [vmem:[#allocation11 + $0x10] sm:$0xf]
    %v315 = vld [vmem:[#allocation11 + $0x14] sm:$0xf]
    %v316 = vld [vmem:[#allocation11 + $0x18] sm:$0xf]
    %v317 = vld [vmem:[#allocation11 + $0x1c] sm:$0xf]
    %v318 = vld [vmem:[#allocation11 + $0x20] sm:$0xf]
    %v319 = vld [vmem:[#allocation11 + $0x24] sm:$0xf]
    %v320 = vld [vmem:[#allocation11 + $0x28] sm:$0xf]
    %v321 = vld [vmem:[#allocation11 + $0x2c] sm:$0xf]
    %v322 = vld [vmem:[#allocation11 + $0x30] sm:$0xf]
    %v323 = vld [vmem:[#allocation11 + $0x34] sm:$0xf]
    %v324 = vld [vmem:[#allocation11 + $0x38] sm:$0xf]
    %v325 = vld [vmem:[#allocation11 + $0x3c] sm:$0xf]
    %v326 = vld [vmem:[#allocation11 + $0x40] sm:$0xf]
    %v327 = vld [vmem:[#allocation11 + $0x44] sm:$0xf]
    %v328 = vld [vmem:[#allocation11 + $0x48] sm:$0xf]
    %v329 = vld [vmem:[#allocation11 + $0x4c] sm:$0xf]
    %v330 = vld [vmem:[#allocation11 + $0x50] sm:$0xf]
    %v331 = vld [vmem:[#allocation11 + $0x54] sm:$0xf]
    %v332 = vld [vmem:[#allocation11 + $0x58] sm:$0xf]
    %v333 = vld [vmem:[#allocation11 + $0x5c] sm:$0xf]
    %v334 = vld [vmem:[#allocation11 + $0x60] sm:$0xf]
    %v335 = vld [vmem:[#allocation11 + $0x64] sm:$0xf]
    %v336 = vld [vmem:[#allocation11 + $0x68] sm:$0xf]
    %v337 = vld [vmem:[#allocation11 + $0x6c] sm:$0xf]
    %v338 = vld [vmem:[#allocation11 + $0x70] sm:$0xf]
    %v339 = vld [vmem:[#allocation11 + $0x74] sm:$0xf]
    %v340 = vld [vmem:[#allocation11 + $0x78] sm:$0xf]
    %v341 = vld [vmem:[#allocation11 + $0x7c] sm:$0xf]
    %v342 = vld [vmem:[%s6] sm:$0x1]
    %v344 = vperm.slane %v342, 0
    %v378 = vunpack.c.l.b16 %v310
    %v379 = vunpack.c.l.b16 %v311
    %v380 = vunpack.c.l.b16 %v312
    %v381 = vunpack.c.l.b16 %v313
    %v382 = vunpack.c.l.b16 %v314
    %v383 = vunpack.c.l.b16 %v315
    %v384 = vunpack.c.l.b16 %v316
    %v385 = vunpack.c.l.b16 %v317
    %v386 = vunpack.c.l.b16 %v318
    %v387 = vunpack.c.l.b16 %v319
    %v388 = vunpack.c.l.b16 %v320
    %v389 = vunpack.c.l.b16 %v321
    %v390 = vunpack.c.l.b16 %v322
    %v391 = vunpack.c.l.b16 %v323
    %v392 = vunpack.c.l.b16 %v324
    %v393 = vunpack.c.l.b16 %v325
    %v394 = vunpack.c.l.b16 %v326
    %v395 = vunpack.c.l.b16 %v327
    %v396 = vunpack.c.l.b16 %v328
    %v397 = vunpack.c.l.b16 %v329
    %v398 = vunpack.c.l.b16 %v330
    %v399 = vunpack.c.l.b16 %v331
    %v400 = vunpack.c.l.b16 %v332
    %v401 = vunpack.c.l.b16 %v333
    %v402 = vunpack.c.l.b16 %v334
    %v403 = vunpack.c.l.b16 %v335
    %v404 = vunpack.c.l.b16 %v336
    %v405 = vunpack.c.l.b16 %v337
    %v406 = vunpack.c.l.b16 %v338
    %v407 = vunpack.c.l.b16 %v339
    %v408 = vunpack.c.l.b16 %v340
    %v409 = vunpack.c.l.b16 %v341
    %v410 = vpack.c.b16 %v379, %v378
    %v411 = vpack.c.b16 %v381, %v380
    %v412 = vpack.c.b16 %v383, %v382
    %v413 = vpack.c.b16 %v385, %v384
    %v414 = vpack.c.b16 %v387, %v386
    %v415 = vpack.c.b16 %v389, %v388
    %v416 = vpack.c.b16 %v391, %v390
    %v417 = vpack.c.b16 %v393, %v392
    %v418 = vpack.c.b16 %v395, %v394
    %v419 = vpack.c.b16 %v397, %v396
    %v420 = vpack.c.b16 %v399, %v398
    %v421 = vpack.c.b16 %v401, %v400
    %v422 = vpack.c.b16 %v403, %v402
    %v423 = vpack.c.b16 %v405, %v404
    %v424 = vpack.c.b16 %v407, %v406
    %v425 = vpack.c.b16 %v409, %v408
    %442 = vmatpush.bf16.msra.mxu0 %v417
    %443 = vmatpush.bf16.msra.mxu0 %v416
    %444 = vmatpush.bf16.msra.mxu0 %v415
    %445 = vmatpush.bf16.msra.mxu0 %v414
    %446 = vmatpush.bf16.msra.mxu0 %v413
    %447 = vmatpush.bf16.msra.mxu0 %v412
    %448 = vmatpush.bf16.msra.mxu0 %v411
    %449 = vmatpush.bf16.msra.mxu0 %v410
    %450 = vmatmul.bf16.gmra.mxu0 %v308
    %v451 = vpop.f32.mrf.mxu0
    %v452 = vadd.f32 %v344, %v451
    %v453 = vpop.f32.mrf.mxu0
    %454 = vdwg.mxu0
    %455 = vmatpush.bf16.msra.mxu0 %v425
    %456 = vmatpush.bf16.msra.mxu0 %v424
    %457 = vmatpush.bf16.msra.mxu0 %v423
    %458 = vmatpush.bf16.msra.mxu0 %v422
    %459 = vmatpush.bf16.msra.mxu0 %v421
    %460 = vmatpush.bf16.msra.mxu0 %v420
    %461 = vmatpush.bf16.msra.mxu0 %v419
    %462 = vmatpush.bf16.msra.mxu0 %v418
    %463 = vmatmul.bf16.gmra.mxu0 %v309
    %v464 = vpop.f32.mrf.mxu0
    %v465 = vadd.f32 %v452, %v464
    %v466 = vpop.f32.mrf.mxu0
    %467 = vdwg.mxu0
    %v468 = vmax.f32 %v465, 0.0
    %v469 = vpack.c.bf16 %v468, %v468
    %v470 = vld [vmem:[#allocation13] sm:$0xf]
    %v471 = vld [vmem:[#allocation13 + $0x4] sm:$0xf]
    %v472 = vld [vmem:[#allocation13 + $0x8] sm:$0xf]
    %v473 = vld [vmem:[#allocation13 + $0xc] sm:$0xf]
    %v474 = vld [vmem:[#allocation13 + $0x10] sm:$0xf]
    %v475 = vld [vmem:[#allocation13 + $0x14] sm:$0xf]
    %v476 = vld [vmem:[#allocation13 + $0x18] sm:$0xf]
    %v477 = vld [vmem:[#allocation13 + $0x1c] sm:$0xf]
    %v478 = vld [vmem:[#allocation13 + $0x20] sm:$0xf]
    %v479 = vld [vmem:[#allocation13 + $0x24] sm:$0xf]
    %v480 = vld [vmem:[#allocation13 + $0x28] sm:$0xf]
    %v481 = vld [vmem:[#allocation13 + $0x2c] sm:$0xf]
    %v482 = vld [vmem:[#allocation13 + $0x30] sm:$0xf]
    %v483 = vld [vmem:[#allocation13 + $0x34] sm:$0xf]
    %v484 = vld [vmem:[#allocation13 + $0x38] sm:$0xf]
    %v485 = vld [vmem:[#allocation13 + $0x3c] sm:$0xf]
    %v486 = vld [vmem:[%s8] sm:$0x1]
    %v488 = vperm.slane %v486, 0
    %v506 = vunpack.c.l.b16 %v470
    %v507 = vunpack.c.l.b16 %v471
    %v508 = vunpack.c.l.b16 %v472
    %v509 = vunpack.c.l.b16 %v473
    %v510 = vunpack.c.l.b16 %v474
    %v511 = vunpack.c.l.b16 %v475
    %v512 = vunpack.c.l.b16 %v476
    %v513 = vunpack.c.l.b16 %v477
    %v514 = vunpack.c.l.b16 %v478
    %v515 = vunpack.c.l.b16 %v479
    %v516 = vunpack.c.l.b16 %v480
    %v517 = vunpack.c.l.b16 %v481
    %v518 = vunpack.c.l.b16 %v482
    %v519 = vunpack.c.l.b16 %v483
    %v520 = vunpack.c.l.b16 %v484
    %v521 = vunpack.c.l.b16 %v485
    %v522 = vpack.c.b16 %v507, %v506
    %v523 = vpack.c.b16 %v509, %v508
    %v524 = vpack.c.b16 %v511, %v510
    %v525 = vpack.c.b16 %v513, %v512
    %v526 = vpack.c.b16 %v515, %v514
    %v527 = vpack.c.b16 %v517, %v516
    %v528 = vpack.c.b16 %v519, %v518
    %v529 = vpack.c.b16 %v521, %v520
    %538 = vmatpush.bf16.msra.mxu0 %v529
    %539 = vmatpush.bf16.msra.mxu0 %v528
    %540 = vmatpush.bf16.msra.mxu0 %v527
    %541 = vmatpush.bf16.msra.mxu0 %v526
    %542 = vmatpush.bf16.msra.mxu0 %v525
    %543 = vmatpush.bf16.msra.mxu0 %v524
    %544 = vmatpush.bf16.msra.mxu0 %v523
    %545 = vmatpush.bf16.msra.mxu0 %v522
    %546 = vmatmul.bf16.gmra.mxu0 %v469
    %v547 = vpop.f32.mrf.mxu0
    %v548 = vadd.f32 %v488, %v547
    %v549 = vpop.f32.mrf.mxu0
    %550 = vdwg.mxu0
    %551 = vst [vmem:[#allocation14] sm:$0xff] %v548
    // Predicated region
    $region66: #{dqn_forward.1} parent=1 // pred_check
      _
    $region67: #{dqn_forward.1} parent=1 // pred_check_branch
      %553 = sbr.rel (0) target = $region69
    $region68: #{dqn_forward.1} parent=1 // pred_region
      %555 = vsyncadd [#allocation4], 0
      %s557 = sshll.u32 [#allocation14], 4
      %s558 = int_to_ptr.vmem [resolvable:$true] %s557
      %s559 = sshll.u32 %s9, 4
      %s560 = int_to_ptr.hbm [resolvable:$true] %s559
      %562 = dma.vmem_to_hbm [thread:$0]  %s558, 128, %s560, [#allocation4]
    $region69: #{dqn_forward.1} parent=1 // pred_fallthru
      _
    // Predicated region
    $region70: #{dqn_forward.1} parent=1 // pred_check
      _
    $region71: #{dqn_forward.1} parent=1 // pred_check_branch
      %564 = sbr.rel (0) target = $region73
    $region72: #{dqn_forward.1} parent=1 // pred_region
      %566 = dma.done [#allocation4], 128
    $region73: #{dqn_forward.1} parent=1 // pred_fallthru
      _
    %567 = vsyncpa [#allocation3], 1
    %568 = vsyncpa [#allocation6], 1
    %569 = vsyncpa [#allocation9], 1
    %570 = vsyncpa [#allocation12], 1
    %571 = vsyncpa [#allocation4], 1

</llo_original>
